<compile_context>
chip_gen: v7x
topology: tpu7x:2x2x1
jax: 0.10.0
libtpu: 0.0.40
codegen_flags: <defaults>
</compile_context>

<pallas_src>
import jax
import jax.numpy as jnp
from jax.experimental import pallas as pl
from jax.experimental.pallas import tpu as pltpu


def _round_down(v, m):
    return (v // m) * m


def _round_up(v, m):
    return ((v + m - 1) // m) * m


# --------------------------- kernels ----------------------------------------


def _gate_kernel_fast(x_ref, o_ref):
    # x_ref: (tb, 2, tr, 128)   o_ref: (tb, tr, 128)
    a = x_ref[:, 0].astype(jnp.float32)
    g = x_ref[:, 1].astype(jnp.float32)
    sig = 1.0 / (1.0 + jnp.exp(-g))          # exp goes to the EUP slot
    o_ref[...] = (a * sig).astype(o_ref.dtype)


def _gate_kernel_fallback(x_ref, o_ref):
    # x_ref: (2, tc, S)   o_ref: (tc, S)
    a = x_ref[0].astype(jnp.float32)
    g = x_ref[1].astype(jnp.float32)
    sig = 1.0 / (1.0 + jnp.exp(-g))
    o_ref[...] = (a * sig).astype(o_ref.dtype)


# --------------------------- wrapper -----------------------------------------


def gate_forward(x, *, half_block_budget_bytes=2 * 1024 * 1024):
    """out = x[:, :C] * sigmoid(x[:, C:])  for x of shape (B, 2C, H, W)."""
    B, C2, H, W = x.shape
    if C2 % 2 != 0:
        raise ValueError("Gate requires an even number of channels")
    C = C2 // 2
    N = C * H * W                             # elements per half, per batch
    itemsize = jnp.dtype(x.dtype).itemsize
    # Native sublane packing: 8 rows (f32), 16 (bf16/f16), 32 (int8/fp8).
    align = max(8, 32 // itemsize)
    # Total live blocks stay well under 32 MiB (merged-in + out, x2 buffers),
    # safe on v5e/v6e (128 MiB VMEM) and v7x (64 MiB physical).
    vmem_limit = 32 * 1024 * 1024

    if N % 128 == 0:
        # ---- fast path: lane-dense (rows, 128) layout ------------------------
        R = N // 128
        x5 = x.reshape(B, 2, R, 128)          # free reshape, no HBM rewrite
        row_bytes = 128 * itemsize

        # Batch tile: keep the full batch per block only while the *minimum*
        # row tile still fits the per-half budget (guards large B).
        if B * align * row_bytes <= half_block_budget_bytes:
            tb = B
        else:
            tb = max(1, half_block_budget_bytes // (align * row_bytes))

        # Row tile: multiple of `align` (or full R when R < align), bounded by
        # the per-half budget.  Ragged R is handled by Pallas edge masking.
        if R <= align:
            tr = R
        else:
            budget_rows = half_block_budget_bytes // (tb * row_bytes)
            tr = min(_round_down(R, align),
                     max(align, _round_down(budget_rows, align)))

        # v7x megacore: ensure >= 2 grid steps whenever the work is splittable
        # so both TensorCores (and their DMA issue capacity) are used.
        if pl.cdiv(B, tb) * pl.cdiv(R, tr) == 1:
            if R > align:
                half = _round_up(pl.cdiv(R, 2), align)
                if half < R:
                    tr = half
            elif B > 1:
                tb = pl.cdiv(B, 2)

        grid = (pl.cdiv(B, tb), pl.cdiv(R, tr))

        out = pl.pallas_call(
            _gate_kernel_fast,
            out_shape=jax.ShapeDtypeStruct((B, R, 128), x.dtype),
            grid_spec=pltpu.PrefetchScalarGridSpec(
                num_scalar_prefetch=0,
                grid=grid,
                in_specs=[
                    # Single merged block carrying both halves: one DMA stream.
                    pl.BlockSpec((tb, 2, tr, 128), lambda b, r: (b, 0, r, 0)),
                ],
                out_specs=pl.BlockSpec((tb, tr, 128), lambda b, r: (b, r, 0)),
            ),
            compiler_params=pltpu.CompilerParams(
                dimension_semantics=("parallel", "parallel"),
                vmem_limit_bytes=vmem_limit,
            ),
        )(x5)
        return out.reshape(B, C, H, W)

    # ---- fallback: per-half element count not a multiple of 128 --------------
    # Tile over batch and channels; the spatial dim stays full-extent (always
    # layout-legal, at the cost of masked lanes when S % 128 != 0).
    # TODO(synk): if H*W alone ever exceeds the per-half budget, also tile the
    # spatial axis (needs a 128-divisible factorization of H*W).
    S = H * W
    x4 = x.reshape(B, 2, C, S)
    if C <= align:
        tc = C                                 # full extent: always legal
    else:
        budget_rows = half_block_budget_bytes // max(1, S * itemsize)
        tc = min(_round_down(C, align),
                 max(align, _round_down(budget_rows, align)))

    grid = (B, pl.cdiv(C, tc))
    out = pl.pallas_call(
        _gate_kernel_fallback,
        out_shape=jax.ShapeDtypeStruct((B, C, S), x.dtype),
        grid_spec=pltpu.PrefetchScalarGridSpec(
            num_scalar_prefetch=0,
            grid=grid,
            in_specs=[
                pl.BlockSpec((pl.Squeezed(), 2, tc, S),
                             lambda b, c: (b, 0, c, 0)),
            ],
            out_specs=pl.BlockSpec((pl.Squeezed(), tc, S),
                                   lambda b, c: (b, c, 0)),
        ),
        compiler_params=pltpu.CompilerParams(
            dimension_semantics=("parallel", "parallel"),
            vmem_limit_bytes=vmem_limit,
        ),
    )(x4)
    return out.reshape(B, C, H, W)


def _reference_forward(x):
    outputs, gate = jnp.split(x, 2, axis=1)
    return outputs * jax.nn.sigmoid(gate)


if __name__ == "__main__":
    key = jax.random.PRNGKey(0)

    test_shapes = [
        (2, 8, 16, 16),    # fast path, R a multiple of the alignment
        (2, 10, 16, 16),   # fast path, ragged R=10 -> exercises edge masking
        (2, 4, 6, 7),      # fallback path (per-half elems not % 128)
    ]
    for shape in test_shapes:
        key, sub = jax.random.split(key)
        x = jax.random.normal(sub, shape, dtype=jnp.float32)
        out = jax.block_until_ready(gate_forward(x))
        ref = jax.block_until_ready(_reference_forward(x))
        assert out.shape == ref.shape, f"shape mismatch for {shape}"
        assert jnp.allclose(out, ref, atol=1e-5, rtol=1e-5), \
            f"mismatch vs reference gate for {shape}"

    print("KERNEL_OK")
</pallas_src>

<mosaic_0001>
module attributes {stable_mosaic.version = 11 : i64} {
  func.func @_gate_kernel_fast(%arg0: i32, %arg1: i32, %arg2: memref<1x2x8x128xf32, #tpu.memory_space<vmem>>, %arg3: memref<1x8x128xf32, #tpu.memory_space<vmem>>) attributes {dimension_semantics = [#tpu.dimension_semantics<parallel>, #tpu.dimension_semantics<parallel>], iteration_bounds = array<i64: 2, 1>, scalar_prefetch = 0 : i64, scratch_operands = 0 : i64, tpu.core_type = #tpu.core_type<tc>, window_params = [{transform_indices = @transform_0, window_bounds = array<i64: 1, 2, 8, 128>}, {transform_indices = @transform_1, window_bounds = array<i64: 1, 8, 128>}]} {
    %c0 = arith.constant 0 : index
    %c0_0 = arith.constant 0 : index
    %c0_1 = arith.constant 0 : index
    %c0_2 = arith.constant 0 : index
    %0 = vector.load %arg2[%c0, %c0_0, %c0_1, %c0_2] : memref<1x2x8x128xf32, #tpu.memory_space<vmem>>, vector<1x1x8x128xf32>
    %1 = vector.shape_cast %0 : vector<1x1x8x128xf32> to vector<1x8x128xf32>
    %c0_3 = arith.constant 0 : index
    %c1 = arith.constant 1 : index
    %c0_4 = arith.constant 0 : index
    %c0_5 = arith.constant 0 : index
    %2 = vector.load %arg2[%c0_3, %c1, %c0_4, %c0_5] : memref<1x2x8x128xf32, #tpu.memory_space<vmem>>, vector<1x1x8x128xf32>
    %3 = vector.shape_cast %2 : vector<1x1x8x128xf32> to vector<1x8x128xf32>
    %cst = arith.constant 0.000000e+00 : f32
    %4 = vector.broadcast %cst : f32 to vector<1x8x128xf32>
    %5 = arith.subf %4, %3 : vector<1x8x128xf32>
    %6 = math.exp %5 : vector<1x8x128xf32>
    %cst_6 = arith.constant 1.000000e+00 : f32
    %7 = vector.broadcast %cst_6 : f32 to vector<1x8x128xf32>
    %8 = arith.addf %7, %6 : vector<1x8x128xf32>
    %cst_7 = arith.constant 1.000000e+00 : f32
    %9 = vector.broadcast %cst_7 : f32 to vector<1x8x128xf32>
    %10 = arith.divf %9, %8 : vector<1x8x128xf32>
    %11 = arith.mulf %1, %10 : vector<1x8x128xf32>
    %c0_8 = arith.constant 0 : index
    %c0_9 = arith.constant 0 : index
    %c0_10 = arith.constant 0 : index
    %12 = vector.load %arg3[%c0_8, %c0_9, %c0_10] : memref<1x8x128xf32, #tpu.memory_space<vmem>>, vector<1x8x128xf32>
    tpu.vector_store %arg3[%c0_8, %c0_9, %c0_10], %11 {strides = array<i32>} : memref<1x8x128xf32, #tpu.memory_space<vmem>>, vector<1x8x128xf32>,
    return
  }
  func.func @transform_0(%arg0: i32, %arg1: i32) -> (i32, i32, i32, i32) {
    %c0_i32 = arith.constant 0 : i32
    %c0_i32_0 = arith.constant 0 : i32
    %c0_i32_1 = arith.constant 0 : i32
    return %arg0, %c0_i32, %arg1, %c0_i32_0 : i32, i32, i32, i32
  }
  func.func @transform_1(%arg0: i32, %arg1: i32) -> (i32, i32, i32) {
    %c0_i32 = arith.constant 0 : i32
    %c0_i32_0 = arith.constant 0 : i32
    return %arg0, %arg1, %c0_i32 : i32, i32, i32
  }
}

</mosaic_0001>

<llo_original>
// kernel: tpu_custom_call.1
$region0: #{tpu_custom_call.1}
  #allocation0 [shape = 'u32[]', space=smem, size = 0x4, offset = 0x4, fixed_abs, tag = 'smem constant byte address 0x4 - core index']
  #allocation1 [shape = 'u32[144,128]{1,0:T(1,128)}', space=vmem, size = 0x12000, scoped, tag = 'internal scratch']
  %s0 = inlined_call_operand.hbm [shape: f32[2,2,8,128], index: 0, kind: input, shape index: {}]
  %s1 = inlined_call_operand.hbm [shape: f32[2,8,128], index: 1, kind: output, shape index: {}]
  %s2 = sld [smem:[#allocation0]]
  $region41: #{tpu_custom_call.1} parent=0
    _
  %s4 = ssub.s32 1, %s2
  %s5 = scalar_select 0, %s4, %s2
  $region1: #{tpu_custom_call.1} parent=0
    #allocation2 [shape = 'u8[16384]{0}', space=vmem, size = 0x4000, scoped, tag = 'input window, operand 0']
    #allocation3 [shape = 's32[2]{0}', space=sflag, size = 0x8, scoped, tag = 'scoped memory for tpu_custom_call.1']
    #allocation4 [shape = 's32[2]{0}', space=sflag, size = 0x8, scoped, tag = 'scoped memory for tpu_custom_call.1']
    #allocation5 [shape = 'u8[8192]{0}', space=vmem, size = 0x2000, scoped, tag = 'output window, operand 0']
    %6 = vsyncpa [#allocation3], 0
    %s7 = scalar_lea.sflag [#allocation3], 1
    %8 = vsyncpa %s7, 0
    %9 = vsyncpa [#allocation4], 0
    %s10 = scalar_lea.sflag [#allocation4], 1
    %11 = vsyncpa %s10, 0
    loop: start=0, step=1, limit=4
    $region2: #{tpu_custom_call.1} parent=1 // loop_pre_header
      _
    $region3: #{tpu_custom_call.1} parent=1 // loop_header
      %s13 = sphi 0, %s17
      %p14 = scmp.ge.s32.totalorder %s13, 4
      %s20 = sphi 0, %s32
      %s21 = sphi 0, %s28
      %s22 = sphi 0, %s20
      %s23 = sphi 0, %s21
      %s24 = sphi 0, %s22
      %s25 = sphi 0, %s23
      %s37 = sphi 0, %s39
      %s40 = sphi 0, %s37
      %s41 = sphi 0, %s40
      %s57 = sphi 0, %s41
      %s65 = sphi 0, %s67
      %s68 = sphi 0, %s65
      %s69 = sphi 0, %s68
      %s85 = sphi 0, %s69
    $region4: #{tpu_custom_call.1} parent=1 // loop_header_branch
      %16 = sbr.rel (%p14) target = $region8
    $region5: #{tpu_custom_call.1} parent=1 // loop_body
      %s18 = ssub.s32 %s13, 1
      %s19 = ssub.s32 %s13, 2
      %s26 = sadd.s32 1, %s21
      %p27 = scmp.ge.s32.totalorder %s26, 1
      %s28 = scalar_select %p27, 0, %s26
      %s29 = sadd.s32 1, %s20
      %s30 = scalar_select %p27, %s29, %s20
      %p31 = scmp.ge.s32.totalorder %s30, 2
      %s32 = scalar_select %p31, 0, %s30
      %s33 = ssub.s32 %s20, %s32
      %s34 = ssub.s32 %s21, %s28
      %s35 = sor.u32 %s33, %s34
      %p36 = scmp.eq.s32.totalorder %s35, 0
      %s38 = sadd.s32 %s37, 1
      %s39 = scalar_select %p36, %s37, %s38
      %p42 = pneg %p36
      %p43 = scmp.eq.s32.totalorder %s13, 1
      %p44 = por %p42, %p43
      %p45 = scmp.ne.s32.totalorder %s37, %s40
      %p46 = scmp.eq.s32.totalorder %s13, 0
      %p47 = por %p45, %p46
      %p48 = scmp.ne.s32.totalorder %s37, %s40
      %p49 = scmp.eq.s32.totalorder %s18, 1
      %p50 = por %p48, %p49
      %p51 = scmp.ne.s32.totalorder %s40, %s41
      %p52 = scmp.eq.s32.totalorder %s18, 0
      %p53 = por %p51, %p52
      %p54 = scmp.ne.s32.totalorder %s40, %s41
      %p55 = scmp.eq.s32.totalorder %s19, 1
      %p56 = por %p54, %p55
      %p58 = scmp.ne.s32.totalorder %s41, %s57
      %p59 = scmp.eq.s32.totalorder %s19, 0
      %p60 = por %p58, %p59
      %s61 = ssub.s32 %s20, %s32
      %s62 = ssub.s32 %s21, %s28
      %s63 = sor.u32 %s61, %s62
      %p64 = scmp.eq.s32.totalorder %s63, 0
      %s66 = sadd.s32 %s65, 1
      %s67 = scalar_select %p64, %s65, %s66
      %p70 = pneg %p64
      %p71 = scmp.eq.s32.totalorder %s13, 1
      %p72 = por %p70, %p71
      %p73 = scmp.ne.s32.totalorder %s65, %s68
      %p74 = scmp.eq.s32.totalorder %s13, 0
      %p75 = por %p73, %p74
      %p76 = scmp.ne.s32.totalorder %s65, %s68
      %p77 = scmp.eq.s32.totalorder %s18, 1
      %p78 = por %p76, %p77
      %p79 = scmp.ne.s32.totalorder %s68, %s69
      %p80 = scmp.eq.s32.totalorder %s18, 0
      %p81 = por %p79, %p80
      %p82 = scmp.ne.s32.totalorder %s68, %s69
      %p83 = scmp.eq.s32.totalorder %s19, 1
      %p84 = por %p82, %p83
      %p86 = scmp.ne.s32.totalorder %s69, %s85
      %p87 = scmp.eq.s32.totalorder %s19, 0
      %p88 = por %p86, %p87
      %p89 = scmp.le.s32.totalorder 1, %s13
      %p90 = scmp.lt.s32.totalorder %s13, 3
      %p91 = pnand %p89, %p90
      %p92 = pneg %p91
      // Predicated region
      $region9: #{tpu_custom_call.1} parent=5 // pred_check
        _
      $region10: #{tpu_custom_call.1} parent=5 // pred_check_branch
        %94 = sbr.rel (%p91) target = $region12
      $region11: #{tpu_custom_call.1} parent=5 // pred_region
        %s95 = ssub.s32 %s13, 1
      $region12: #{tpu_custom_call.1} parent=5 // pred_fallthru
        _
      %p96 = scmp.lt.s32.totalorder %s13, 2
      // Predicated region
      $region13: #{tpu_custom_call.1} parent=5 // pred_check
        %p97 = pneg %p96
      $region14: #{tpu_custom_call.1} parent=5 // pred_check_branch
        %99 = sbr.rel (%p97) target = $region16
      $region15: #{tpu_custom_call.1} parent=5 // pred_region
        // Predicated region
        $region17: #{tpu_custom_call.1} parent=15 // pred_check
          %p100 = pneg %p47
        $region18: #{tpu_custom_call.1} parent=15 // pred_check_branch
          %102 = sbr.rel (%p100) target = $region20
        $region19: #{tpu_custom_call.1} parent=15 // pred_region
          %s103 = sand.u32 %s37, 1
          %s104 = scalar_lea.sflag [#allocation3], %s103
          %s105 = sand.u32 %s37, 1
          %s106 = smul.addr %s105, 16
          %s107 = scalar_lea.vmem [#allocation2], %s106
          %s109 = ssub.s32 256, 256
          %110 = vsyncadd %s104, %s109
          %s111 = smul.addr %s20, 2
          %s112 = sadd.s32 %s21, %s111
          %s113 = smul.addr %s112, 128
          %s114 = scalar_lea.hbm %s0, %s113
          %s115 = sshll.u32 %s107, 4
          %s116 = int_to_ptr.vmem [resolvable:$true] %s115
          %121 = dma.hbm_to_vmem [thread:$0]  %s114, 256, %s116, %s104, 128, 128, 8
        $region20: #{tpu_custom_call.1} parent=15 // pred_fallthru
          _
      $region16: #{tpu_custom_call.1} parent=5 // pred_fallthru
        _
      %p122 = scmp.le.s32.totalorder 1, %s13
      %p123 = scmp.lt.s32.totalorder %s13, 3
      %p124 = pnand %p122, %p123
      %p125 = pneg %p124
      // Predicated region
      $region21: #{tpu_custom_call.1} parent=5 // pred_check
        _
      $region22: #{tpu_custom_call.1} parent=5 // pred_check_branch
        %127 = sbr.rel (%p124) target = $region24
      $region23: #{tpu_custom_call.1} parent=5 // pred_region
        %s128 = ssub.s32 %s13, 1
        %s129 = sand.u32 %s40, 1
        %s130 = scalar_lea.sflag [#allocation3], %s129
        %s131 = sand.u32 %s40, 1
        %s132 = smul.addr %s131, 16
        %s133 = scalar_lea.vmem [#allocation2], %s132
        // Predicated region
        $region25: #{tpu_custom_call.1} parent=23 // pred_check
          %p134 = pneg %p53
        $region26: #{tpu_custom_call.1} parent=23 // pred_check_branch
          %136 = sbr.rel (%p134) target = $region28
        $region27: #{tpu_custom_call.1} parent=23 // pred_region
          %137 = dma.done %s130, 256
        $region28: #{tpu_custom_call.1} parent=23 // pred_fallthru
          _
        %s138 = sand.u32 %s40, 1
        %s139 = scalar_lea.sflag [#allocation3], %s138
        %s140 = sand.u32 %s40, 1
        %s141 = smul.addr %s140, 16
        %s142 = scalar_lea.vmem [#allocation2], %s141
        %p143 = pneg %p53
        %p144 = pneg %p50
        %p145 = pneg %p81
        %p146 = pneg %p78
        %s147 = sand.u32 %s68, 1
        %s148 = scalar_lea.sflag [#allocation4], %s147
        %s149 = sand.u32 %s68, 1
        %s150 = smul.addr %s149, 8
        %s151 = scalar_lea.vmem [#allocation5], %s150
        %v152 = vld [vmem:[%s133] sm:$0xff]
        %s153 = scalar_lea.vmem %s133, 8 [#allocation2]
        %v154 = vld [vmem:[%s153] sm:$0xff]
        %v155 = vsub.f32 0.0, %v154
        %v156 = vmul.f32 %v155, 1.442695
        %v157 = vpow.pop %v156
        %v158 = vadd.f32 %v157, 1.0
        %v159 = vrcp.pop %v158
        %v160 = vmul.f32 1.0, %v159
        %v161 = vmul.f32 %v152, %v160
        %162 = vst [vmem:[%s151] sm:$0xff] %v161
        %s163 = sand.u32 %s68, 1
        %s164 = scalar_lea.sflag [#allocation4], %s163
        %s165 = sand.u32 %s68, 1
        %s166 = smul.addr %s165, 8
        %s167 = scalar_lea.vmem [#allocation5], %s166
        // Predicated region
        $region29: #{tpu_custom_call.1} parent=23 // pred_check
          %p168 = pneg %p78
        $region30: #{tpu_custom_call.1} parent=23 // pred_check_branch
          %170 = sbr.rel (%p168) target = $region32
        $region31: #{tpu_custom_call.1} parent=23 // pred_region
          %s172 = ssub.s32 128, 128
          %173 = vsyncadd %s164, %s172
          %s174 = sadd.s32 %s23, %s22
          %s175 = smul.addr %s174, 128
          %s176 = scalar_lea.hbm %s1, %s175
          %s178 = sshll.u32 %s167, 4
          %s179 = int_to_ptr.vmem [resolvable:$true] %s178
          %181 = dma.vmem_to_hbm [thread:$0]  %s179, 128, %s176, %s164
        $region32: #{tpu_custom_call.1} parent=23 // pred_fallthru
          _
      $region24: #{tpu_custom_call.1} parent=5 // pred_fallthru
        _
      %p182 = scmp.le.s32.totalorder 2, %s13
      // Predicated region
      $region33: #{tpu_custom_call.1} parent=5 // pred_check
        %p183 = pneg %p182
      $region34: #{tpu_custom_call.1} parent=5 // pred_check_branch
        %185 = sbr.rel (%p183) target = $region36
      $region35: #{tpu_custom_call.1} parent=5 // pred_region
        %s186 = ssub.s32 %s13, 2
        // Predicated region
        $region37: #{tpu_custom_call.1} parent=35 // pred_check
          %p187 = pneg %p84
        $region38: #{tpu_custom_call.1} parent=35 // pred_check_branch
          %189 = sbr.rel (%p187) target = $region40
        $region39: #{tpu_custom_call.1} parent=35 // pred_region
          %s190 = sand.u32 %s69, 1
          %s191 = scalar_lea.sflag [#allocation4], %s190
          %s192 = sand.u32 %s69, 1
          %s193 = smul.addr %s192, 8
          %s194 = scalar_lea.vmem [#allocation5], %s193
          %195 = dma.done %s191, 128
        $region40: #{tpu_custom_call.1} parent=35 // pred_fallthru
          _
      $region36: #{tpu_custom_call.1} parent=5 // pred_fallthru
        _
    $region6: #{tpu_custom_call.1} parent=1 // loop_footer
      %s17 = sadd.s32 1, %s13
    $region7: #{tpu_custom_call.1} parent=1 // loop_footer_branch
      %12 = sbr.rel target = $region3
    $region8: #{tpu_custom_call.1} parent=1 // loop_exit
      _
    %196 = vsyncpa [#allocation3], 1
    %s197 = scalar_lea.sflag [#allocation3], 1
    %198 = vsyncpa %s197, 1
    %199 = vsyncpa [#allocation4], 1
    %s200 = scalar_lea.sflag [#allocation4], 1
    %201 = vsyncpa %s200, 1

</llo_original>
